<compile_context>
chip_gen: v6e
topology: v6e:2x2x1
jax: 0.10.0
libtpu: 0.0.40
codegen_flags: <defaults>
</compile_context>

<pallas_src>
import functools

import numpy as np
import jax
import jax.numpy as jnp
from jax.experimental import pallas as pl
from jax.experimental.pallas import tpu as pltpu


def _ytmt_conv_kernel(mask_ref, xl_ref, xr_ref, wl_ref, bl_ref, wr_ref, br_ref,
                      outl_ref, outr_ref, *, shifts, skip):
    xl = xl_ref[...]                                    # (C, L) f32, L = N*H*W
    xr = xr_ref[...]
    mask = mask_ref[...]                                # (9*C, L) 0/1 f32, conv padding

    def im2col(x):
        # pltpu.roll follows jnp.roll semantics: out[p] = x[(p - s) mod L], so the
        # static shift table below gives shifted[:, p] == x[:, p + dy*W + dx].
        pieces = [x if s == 0 else pltpu.roll(x, s, 1) for s in shifts]
        patches = jnp.concatenate(pieces, axis=0)       # (9*C, L), tap-major rows
        return patches * mask                           # zero-padding at borders

    patches_l = im2col(xl)
    patches_r = im2col(xr)

    # One K = 9*C matmul per branch instead of 9 tiny K = C matmuls.
    yl = jnp.dot(wl_ref[...], patches_l,
                 preferred_element_type=jnp.float32) + bl_ref[...]
    yr = jnp.dot(wr_ref[...], patches_r,
                 preferred_element_type=jnp.float32) + br_ref[...]

    # Additive YTMT head: relu(y) and y - relu(y) == min(y, 0).
    out_l = jnp.maximum(yl, 0.0) + jnp.minimum(yr, 0.0)
    out_r = jnp.maximum(yr, 0.0) + jnp.minimum(yl, 0.0)

    if skip:                                            # only valid when C_in == C_out
        out_l = out_l + xl
        out_r = out_r + xr

    outl_ref[...] = out_l                               # (C_out, L): unmasked, lane-dense
    outr_ref[...] = out_r


def _build_taps(N, H, W):
    """Static per-tap lane shifts and 0/1 border masks (numpy, trace-time)."""
    HW = H * W
    L = N * HW
    pos = np.arange(L, dtype=np.int64) % HW
    row = pos // W
    col = pos % W
    shifts, masks = [], []
    for kh in range(3):
        for kw in range(3):
            dy, dx = kh - 1, kw - 1
            d = dy * W + dx
            shifts.append(int((-d) % L))
            m = np.ones(L, dtype=np.float32)
            if dy == -1:
                m *= (row >= 1)
            elif dy == 1:
                m *= (row < H - 1)
            if dx == -1:
                m *= (col >= 1)
            elif dx == 1:
                m *= (col < W - 1)
            masks.append(m)
    return tuple(shifts), np.stack(masks, axis=0)       # shifts, (9, L)


def init_params(key, c_in, c_out, k=3):
    """Deterministic parameters in PyTorch Conv2d layout (Cout, Cin, kh, kw)."""
    keys = jax.random.split(key, 4)
    fan_in = c_in * k * k
    bound = 1.0 / (fan_in ** 0.5)

    def u(k_, shape):
        return jax.random.uniform(k_, shape, jnp.float32, -bound, bound)

    return {
        "conv_l_w": u(keys[0], (c_out, c_in, k, k)),
        "conv_l_b": u(keys[1], (c_out,)),
        "conv_r_w": u(keys[2], (c_out, c_in, k, k)),
        "conv_r_b": u(keys[3], (c_out,)),
    }


def ytmt_conv_block(x_l, x_r, params, skip=False):
    N, C, H, W = x_l.shape
    C_out = params["conv_l_w"].shape[0]
    L = N * H * W
    skip = bool(skip) and (C == C_out)                  # mirrors the PyTorch shape check

    shifts, mask9 = _build_taps(N, H, W)
    # Expand to match the tap-major row layout of the concatenated patch matrix.
    mask = jnp.asarray(np.repeat(mask9, C, axis=0))     # (9*C, L)

    def to_lanes(x):                                    # (N,C,H,W) -> (C, N*H*W)
        return jnp.transpose(x, (1, 0, 2, 3)).reshape(C, L)

    def flat_w(w):                                      # (Cout,Cin,3,3) -> (Cout, 9*Cin)
        return jnp.transpose(w.reshape(C_out, C, 9), (0, 2, 1)).reshape(C_out, 9 * C)

    xl = to_lanes(x_l)
    xr = to_lanes(x_r)
    wl = flat_w(params["conv_l_w"])
    wr = flat_w(params["conv_r_w"])
    bl = params["conv_l_b"].reshape(C_out, 1)
    br = params["conv_r_b"].reshape(C_out, 1)

    out_l2, out_r2 = pl.pallas_call(
        functools.partial(_ytmt_conv_kernel, shifts=shifts, skip=skip),
        out_shape=(jax.ShapeDtypeStruct((C_out, L), jnp.float32),
                   jax.ShapeDtypeStruct((C_out, L), jnp.float32)),
        grid_spec=pl.GridSpec(
            grid=(1,),                                  # whole (tiny) batch in one step
            in_specs=[
                pl.BlockSpec((9 * C, L), lambda i: (0, 0)),
                pl.BlockSpec((C, L), lambda i: (0, 0)),
                pl.BlockSpec((C, L), lambda i: (0, 0)),
                pl.BlockSpec((C_out, 9 * C), lambda i: (0, 0)),
                pl.BlockSpec((C_out, 1), lambda i: (0, 0)),
                pl.BlockSpec((C_out, 9 * C), lambda i: (0, 0)),
                pl.BlockSpec((C_out, 1), lambda i: (0, 0)),
            ],
            out_specs=(pl.BlockSpec((C_out, L), lambda i: (0, 0)),
                       pl.BlockSpec((C_out, L), lambda i: (0, 0))),
        ),
        compiler_params=pltpu.CompilerParams(
            dimension_semantics=("arbitrary",)),
    )(mask, xl, xr, wl, bl, wr, br)

    def from_lanes(y):                                  # (Cout, N*H*W) -> (N, Cout, H, W)
        return jnp.transpose(y.reshape(C_out, N, H, W), (1, 0, 2, 3))

    return from_lanes(out_l2), from_lanes(out_r2)


def reference(x_l, x_r, params, skip=False):
    """Pure-JAX reference matching the PyTorch forward (for validation)."""
    def conv(x, w, b):
        y = jax.lax.conv_general_dilated(
            x, w, window_strides=(1, 1), padding=((1, 1), (1, 1)),
            dimension_numbers=('NCHW', 'OIHW', 'NCHW'))
        return y + b.reshape(1, -1, 1, 1)

    yl = conv(x_l, params["conv_l_w"], params["conv_l_b"])
    yr = conv(x_r, params["conv_r_w"], params["conv_r_b"])
    out_l = jnp.maximum(yl, 0.0) + jnp.minimum(yr, 0.0)
    out_r = jnp.maximum(yr, 0.0) + jnp.minimum(yl, 0.0)
    if skip and x_l.shape == out_l.shape and x_r.shape == out_r.shape:
        out_l = out_l + x_l
        out_r = out_r + x_r
    return out_l, out_r


if __name__ == "__main__":
    key = jax.random.PRNGKey(0)
    kl, kr, kp = jax.random.split(key, 3)

    N, C, H, W = 2, 8, 16, 16
    x_l = jax.random.normal(kl, (N, C, H, W), jnp.float32)
    x_r = jax.random.normal(kr, (N, C, H, W), jnp.float32)
    params = init_params(kp, C, C, k=3)

    out_l, out_r = ytmt_conv_block(x_l, x_r, params)
    out_l, out_r = jax.block_until_ready((out_l, out_r))

    ref_l, ref_r = reference(x_l, x_r, params)
    assert out_l.shape == (N, C, H, W), out_l.shape
    assert out_r.shape == (N, C, H, W), out_r.shape
    max_err = max(float(jnp.max(jnp.abs(out_l - ref_l))),
                  float(jnp.max(jnp.abs(out_r - ref_r))))
    assert max_err < 1e-3, f"max_err={max_err}"

    print("KERNEL_OK")
</pallas_src>

<mosaic_0001>
module attributes {stable_mosaic.version = 11 : i64} {
  func.func @_ytmt_conv_kernel(%arg0: i32, %arg1: memref<72x512xf32, #tpu.memory_space<vmem>>, %arg2: memref<8x512xf32, #tpu.memory_space<vmem>>, %arg3: memref<8x512xf32, #tpu.memory_space<vmem>>, %arg4: memref<8x72xf32, #tpu.memory_space<vmem>>, %arg5: memref<8x1xf32, #tpu.memory_space<vmem>>, %arg6: memref<8x72xf32, #tpu.memory_space<vmem>>, %arg7: memref<8x1xf32, #tpu.memory_space<vmem>>, %arg8: memref<8x512xf32, #tpu.memory_space<vmem>>, %arg9: memref<8x512xf32, #tpu.memory_space<vmem>>) attributes {dimension_semantics = [#tpu.dimension_semantics<arbitrary>], iteration_bounds = array<i64: 1>, scalar_prefetch = 0 : i64, scratch_operands = 0 : i64, tpu.core_type = #tpu.core_type<tc>, window_params = [{pipeline_mode = #tpu.pipeline_mode<synchronous>, transform_indices = @transform_0, window_bounds = array<i64: 72, 512>}, {pipeline_mode = #tpu.pipeline_mode<synchronous>, transform_indices = @transform_1, window_bounds = array<i64: 8, 512>}, {pipeline_mode = #tpu.pipeline_mode<synchronous>, transform_indices = @transform_2, window_bounds = array<i64: 8, 512>}, {pipeline_mode = #tpu.pipeline_mode<synchronous>, transform_indices = @transform_3, window_bounds = array<i64: 8, 72>}, {pipeline_mode = #tpu.pipeline_mode<synchronous>, transform_indices = @transform_4, window_bounds = array<i64: 8, 1>}, {pipeline_mode = #tpu.pipeline_mode<synchronous>, transform_indices = @transform_5, window_bounds = array<i64: 8, 72>}, {pipeline_mode = #tpu.pipeline_mode<synchronous>, transform_indices = @transform_6, window_bounds = array<i64: 8, 1>}, {pipeline_mode = #tpu.pipeline_mode<synchronous>, transform_indices = @transform_7, window_bounds = array<i64: 8, 512>}, {pipeline_mode = #tpu.pipeline_mode<synchronous>, transform_indices = @transform_8, window_bounds = array<i64: 8, 512>}]} {
    %c0 = arith.constant 0 : index
    %c0_0 = arith.constant 0 : index
    %0 = vector.load %arg2[%c0, %c0_0] : memref<8x512xf32, #tpu.memory_space<vmem>>, vector<8x512xf32>
    %c0_1 = arith.constant 0 : index
    %c0_2 = arith.constant 0 : index
    %1 = vector.load %arg3[%c0_1, %c0_2] : memref<8x512xf32, #tpu.memory_space<vmem>>, vector<8x512xf32>
    %c0_3 = arith.constant 0 : index
    %c0_4 = arith.constant 0 : index
    %2 = vector.load %arg1[%c0_3, %c0_4] : memref<72x512xf32, #tpu.memory_space<vmem>>, vector<72x512xf32>
    %c17_i32 = arith.constant 17 : i32
    %3 = tpu.dynamic_rotate %0 by %c17_i32 dim 1 : vector<8x512xf32>, i32 -> vector<8x512xf32>
    %c16_i32 = arith.constant 16 : i32
    %4 = tpu.dynamic_rotate %0 by %c16_i32 dim 1 : vector<8x512xf32>, i32 -> vector<8x512xf32>
    %c15_i32 = arith.constant 15 : i32
    %5 = tpu.dynamic_rotate %0 by %c15_i32 dim 1 : vector<8x512xf32>, i32 -> vector<8x512xf32>
    %c1_i32 = arith.constant 1 : i32
    %6 = tpu.dynamic_rotate %0 by %c1_i32 dim 1 : vector<8x512xf32>, i32 -> vector<8x512xf32>
    %c511_i32 = arith.constant 511 : i32
    %7 = tpu.dynamic_rotate %0 by %c511_i32 dim 1 : vector<8x512xf32>, i32 -> vector<8x512xf32>
    %c497_i32 = arith.constant 497 : i32
    %8 = tpu.dynamic_rotate %0 by %c497_i32 dim 1 : vector<8x512xf32>, i32 -> vector<8x512xf32>
    %c496_i32 = arith.constant 496 : i32
    %9 = tpu.dynamic_rotate %0 by %c496_i32 dim 1 : vector<8x512xf32>, i32 -> vector<8x512xf32>
    %c495_i32 = arith.constant 495 : i32
    %10 = tpu.dynamic_rotate %0 by %c495_i32 dim 1 : vector<8x512xf32>, i32 -> vector<8x512xf32>
    %11 = tpu.concatenate %3, %4, %5, %6, %0, %7, %8, %9, %10 in 0 : vector<8x512xf32>, vector<8x512xf32>, vector<8x512xf32>, vector<8x512xf32>, vector<8x512xf32>, vector<8x512xf32>, vector<8x512xf32>, vector<8x512xf32>, vector<8x512xf32> -> vector<72x512xf32>
    %12 = arith.mulf %11, %2 : vector<72x512xf32>
    %c17_i32_5 = arith.constant 17 : i32
    %13 = tpu.dynamic_rotate %1 by %c17_i32_5 dim 1 : vector<8x512xf32>, i32 -> vector<8x512xf32>
    %c16_i32_6 = arith.constant 16 : i32
    %14 = tpu.dynamic_rotate %1 by %c16_i32_6 dim 1 : vector<8x512xf32>, i32 -> vector<8x512xf32>
    %c15_i32_7 = arith.constant 15 : i32
    %15 = tpu.dynamic_rotate %1 by %c15_i32_7 dim 1 : vector<8x512xf32>, i32 -> vector<8x512xf32>
    %c1_i32_8 = arith.constant 1 : i32
    %16 = tpu.dynamic_rotate %1 by %c1_i32_8 dim 1 : vector<8x512xf32>, i32 -> vector<8x512xf32>
    %c511_i32_9 = arith.constant 511 : i32
    %17 = tpu.dynamic_rotate %1 by %c511_i32_9 dim 1 : vector<8x512xf32>, i32 -> vector<8x512xf32>
    %c497_i32_10 = arith.constant 497 : i32
    %18 = tpu.dynamic_rotate %1 by %c497_i32_10 dim 1 : vector<8x512xf32>, i32 -> vector<8x512xf32>
    %c496_i32_11 = arith.constant 496 : i32
    %19 = tpu.dynamic_rotate %1 by %c496_i32_11 dim 1 : vector<8x512xf32>, i32 -> vector<8x512xf32>
    %c495_i32_12 = arith.constant 495 : i32
    %20 = tpu.dynamic_rotate %1 by %c495_i32_12 dim 1 : vector<8x512xf32>, i32 -> vector<8x512xf32>
    %21 = tpu.concatenate %13, %14, %15, %16, %1, %17, %18, %19, %20 in 0 : vector<8x512xf32>, vector<8x512xf32>, vector<8x512xf32>, vector<8x512xf32>, vector<8x512xf32>, vector<8x512xf32>, vector<8x512xf32>, vector<8x512xf32>, vector<8x512xf32> -> vector<72x512xf32>
    %22 = arith.mulf %21, %2 : vector<72x512xf32>
    %c0_13 = arith.constant 0 : index
    %c0_14 = arith.constant 0 : index
    %23 = vector.load %arg4[%c0_13, %c0_14] : memref<8x72xf32, #tpu.memory_space<vmem>>, vector<8x72xf32>
    %cst = arith.constant dense<0.000000e+00> : vector<8x512xf32>
    %24 = tpu.matmul %23, %12, %cst {dimension_numbers = #tpu.dot_dimension_numbers<[1], [0], [0], [1], [0, 0, 1, 1], [], []>} : vector<8x72xf32>, vector<72x512xf32>, vector<8x512xf32> -> vector<8x512xf32>
    %c0_15 = arith.constant 0 : index
    %c0_16 = arith.constant 0 : index
    %25 = vector.load %arg5[%c0_15, %c0_16] : memref<8x1xf32, #tpu.memory_space<vmem>>, vector<8x1xf32>
    %26 = vector.broadcast %25 : vector<8x1xf32> to vector<8x512xf32>
    %27 = arith.addf %24, %26 : vector<8x512xf32>
    %c0_17 = arith.constant 0 : index
    %c0_18 = arith.constant 0 : index
    %28 = vector.load %arg6[%c0_17, %c0_18] : memref<8x72xf32, #tpu.memory_space<vmem>>, vector<8x72xf32>
    %cst_19 = arith.constant dense<0.000000e+00> : vector<8x512xf32>
    %29 = tpu.matmul %28, %22, %cst_19 {dimension_numbers = #tpu.dot_dimension_numbers<[1], [0], [0], [1], [0, 0, 1, 1], [], []>} : vector<8x72xf32>, vector<72x512xf32>, vector<8x512xf32> -> vector<8x512xf32>
    %c0_20 = arith.constant 0 : index
    %c0_21 = arith.constant 0 : index
    %30 = vector.load %arg7[%c0_20, %c0_21] : memref<8x1xf32, #tpu.memory_space<vmem>>, vector<8x1xf32>
    %31 = vector.broadcast %30 : vector<8x1xf32> to vector<8x512xf32>
    %32 = arith.addf %29, %31 : vector<8x512xf32>
    %cst_22 = arith.constant 0.000000e+00 : f32
    %33 = vector.broadcast %cst_22 : f32 to vector<8x512xf32>
    %34 = arith.maximumf %27, %33 : vector<8x512xf32>
    %cst_23 = arith.constant 0.000000e+00 : f32
    %35 = vector.broadcast %cst_23 : f32 to vector<8x512xf32>
    %36 = arith.minimumf %32, %35 : vector<8x512xf32>
    %37 = arith.addf %34, %36 : vector<8x512xf32>
    %cst_24 = arith.constant 0.000000e+00 : f32
    %38 = vector.broadcast %cst_24 : f32 to vector<8x512xf32>
    %39 = arith.maximumf %32, %38 : vector<8x512xf32>
    %cst_25 = arith.constant 0.000000e+00 : f32
    %40 = vector.broadcast %cst_25 : f32 to vector<8x512xf32>
    %41 = arith.minimumf %27, %40 : vector<8x512xf32>
    %42 = arith.addf %39, %41 : vector<8x512xf32>
    %c0_26 = arith.constant 0 : index
    %c0_27 = arith.constant 0 : index
    %43 = vector.load %arg8[%c0_26, %c0_27] : memref<8x512xf32, #tpu.memory_space<vmem>>, vector<8x512xf32>
    tpu.vector_store %arg8[%c0_26, %c0_27], %37 {strides = array<i32>} : memref<8x512xf32, #tpu.memory_space<vmem>>, vector<8x512xf32>,
    %c0_28 = arith.constant 0 : index
    %c0_29 = arith.constant 0 : index
    %44 = vector.load %arg9[%c0_28, %c0_29] : memref<8x512xf32, #tpu.memory_space<vmem>>, vector<8x512xf32>
    tpu.vector_store %arg9[%c0_28, %c0_29], %42 {strides = array<i32>} : memref<8x512xf32, #tpu.memory_space<vmem>>, vector<8x512xf32>,
    return
  }
  func.func @transform_0(%arg0: i32) -> (i32, i32) {
    %c0_i32 = arith.constant 0 : i32
    %c0_i32_0 = arith.constant 0 : i32
    %c0_i32_1 = arith.constant 0 : i32
    return %c0_i32, %c0_i32_0 : i32, i32
  }
  func.func @transform_1(%arg0: i32) -> (i32, i32) {
    %c0_i32 = arith.constant 0 : i32
    %c0_i32_0 = arith.constant 0 : i32
    %c0_i32_1 = arith.constant 0 : i32
    return %c0_i32, %c0_i32_0 : i32, i32
  }
  func.func @transform_2(%arg0: i32) -> (i32, i32) {
    %c0_i32 = arith.constant 0 : i32
    %c0_i32_0 = arith.constant 0 : i32
    %c0_i32_1 = arith.constant 0 : i32
    return %c0_i32, %c0_i32_0 : i32, i32
  }
  func.func @transform_3(%arg0: i32) -> (i32, i32) {
    %c0_i32 = arith.constant 0 : i32
    %c0_i32_0 = arith.constant 0 : i32
    %c0_i32_1 = arith.constant 0 : i32
    return %c0_i32, %c0_i32_0 : i32, i32
  }
  func.func @transform_4(%arg0: i32) -> (i32, i32) {
    %c0_i32 = arith.constant 0 : i32
    %c0_i32_0 = arith.constant 0 : i32
    %c0_i32_1 = arith.constant 0 : i32
    return %c0_i32, %c0_i32_0 : i32, i32
  }
  func.func @transform_5(%arg0: i32) -> (i32, i32) {
    %c0_i32 = arith.constant 0 : i32
    %c0_i32_0 = arith.constant 0 : i32
    %c0_i32_1 = arith.constant 0 : i32
    return %c0_i32, %c0_i32_0 : i32, i32
  }
  func.func @transform_6(%arg0: i32) -> (i32, i32) {
    %c0_i32 = arith.constant 0 : i32
    %c0_i32_0 = arith.constant 0 : i32
    %c0_i32_1 = arith.constant 0 : i32
    return %c0_i32, %c0_i32_0 : i32, i32
  }
  func.func @transform_7(%arg0: i32) -> (i32, i32) {
    %c0_i32 = arith.constant 0 : i32
    %c0_i32_0 = arith.constant 0 : i32
    %c0_i32_1 = arith.constant 0 : i32
    return %c0_i32, %c0_i32_0 : i32, i32
  }
  func.func @transform_8(%arg0: i32) -> (i32, i32) {
    %c0_i32 = arith.constant 0 : i32
    %c0_i32_0 = arith.constant 0 : i32
    %c0_i32_1 = arith.constant 0 : i32
    return %c0_i32, %c0_i32_0 : i32, i32
  }
}

</mosaic_0001>

<llo_original>
// kernel: tpu_custom_call.1
$region0: #{tpu_custom_call.1}
  #allocation0 [shape = 'u32[]', space=smem, size = 0x4, offset = 0x4, fixed_abs, tag = 'smem constant byte address 0x4 - core index']
  #allocation1 [shape = 'u32[144,128]{1,0:T(1,128)}', space=vmem, size = 0x12000, scoped, tag = 'internal scratch']
  %s0 = inlined_call_operand.hbm [shape: f32[72,512], index: 0, kind: input, shape index: {}]
  %s1 = inlined_call_operand.hbm [shape: f32[8,512], index: 1, kind: input, shape index: {}]
  %s2 = inlined_call_operand.hbm [shape: f32[8,512], index: 2, kind: input, shape index: {}]
  %s3 = inlined_call_operand.vmem [shape: f32[8,72], index: 3, kind: input, shape index: {}]
  %s4 = inlined_call_operand.vmem [shape: f32[8,1], index: 4, kind: input, shape index: {}]
  %s5 = inlined_call_operand.vmem [shape: f32[8,72], index: 5, kind: input, shape index: {}]
  %s6 = inlined_call_operand.vmem [shape: f32[8,1], index: 6, kind: input, shape index: {}]
  %s7 = inlined_call_operand.hbm [shape: f32[8,512], index: 7, kind: output, shape index: {0}]
  %s8 = inlined_call_operand.hbm [shape: f32[8,512], index: 8, kind: output, shape index: {1}]
  %9 = xla_tuple %s7, %s8
  %s10 = sld [smem:[#allocation0]]
  $region58: #{tpu_custom_call.1} parent=0
    _
  %s12 = ssub.s32 1, %s10
  %s13 = scalar_select 0, %s12, %s10
  $region1: #{tpu_custom_call.1} parent=0
    #allocation2 [shape = 'u8[147456]{0}', space=vmem, size = 0x24000, scoped, tag = 'input window, operand 0, single buffered']
    #allocation3 [shape = 's32[1]{0}', space=sflag, size = 0x4, scoped, tag = 'scoped memory for tpu_custom_call.1']
    #allocation4 [shape = 's32[1]{0}', space=sflag, size = 0x4, scoped, tag = 'scoped memory for tpu_custom_call.1']
    #allocation5 [shape = 'u8[16384]{0}', space=vmem, size = 0x4000, scoped, tag = 'input window, operand 1, single buffered']
    #allocation6 [shape = 's32[1]{0}', space=sflag, size = 0x4, scoped, tag = 'scoped memory for tpu_custom_call.1']
    #allocation7 [shape = 'u8[16384]{0}', space=vmem, size = 0x4000, scoped, tag = 'input window, operand 2, single buffered']
    #allocation8 [shape = 'u8[16384]{0}', space=vmem, size = 0x4000, scoped, tag = 'output window, operand 0, single buffered']
    #allocation9 [shape = 'u8[16384]{0}', space=vmem, size = 0x4000, scoped, tag = 'output window, operand 1, single buffered']
    #allocation10 [shape = 's32[1]{0}', space=sflag, size = 0x4, scoped, tag = 'scoped memory for tpu_custom_call.1']
    %14 = vsyncpa [#allocation3], 0
    %15 = vsyncpa [#allocation6], 0
    %16 = vsyncpa [#allocation4], 0
    %17 = vsyncpa [#allocation10], 0
    // Predicated region
    $region2: #{tpu_custom_call.1} parent=1 // pred_check
      _
    $region3: #{tpu_custom_call.1} parent=1 // pred_check_branch
      %19 = sbr.rel (0) target = $region5
    $region4: #{tpu_custom_call.1} parent=1 // pred_region
      %s21 = ssub.s32 4608, 4608
      %22 = vsyncadd [#allocation3], %s21
      %s23 = sshll.u32 [#allocation2], 4
      %s24 = int_to_ptr.vmem [resolvable:$true] %s23
      %29 = dma.hbm_to_vmem [thread:$0]  %s0, 4608, %s24, [#allocation3], 512, 512, 32
    $region5: #{tpu_custom_call.1} parent=1 // pred_fallthru
      _
    // Predicated region
    $region6: #{tpu_custom_call.1} parent=1 // pred_check
      _
    $region7: #{tpu_custom_call.1} parent=1 // pred_check_branch
      %31 = sbr.rel (0) target = $region9
    $region8: #{tpu_custom_call.1} parent=1 // pred_region
      %s33 = ssub.s32 512, 512
      %34 = vsyncadd [#allocation6], %s33
      %s36 = sshll.u32 [#allocation5], 4
      %s37 = int_to_ptr.vmem [resolvable:$true] %s36
      %39 = dma.hbm_to_vmem [thread:$0]  %s1, 512, %s37, [#allocation6]
    $region9: #{tpu_custom_call.1} parent=1 // pred_fallthru
      _
    // Predicated region
    $region10: #{tpu_custom_call.1} parent=1 // pred_check
      _
    $region11: #{tpu_custom_call.1} parent=1 // pred_check_branch
      %41 = sbr.rel (0) target = $region13
    $region12: #{tpu_custom_call.1} parent=1 // pred_region
      %s43 = ssub.s32 512, 512
      %44 = vsyncadd [#allocation6], %s43
      %s46 = sshll.u32 [#allocation7], 4
      %s47 = int_to_ptr.vmem [resolvable:$true] %s46
      %49 = dma.hbm_to_vmem [thread:$0]  %s2, 512, %s47, [#allocation6]
    $region13: #{tpu_custom_call.1} parent=1 // pred_fallthru
      _
    // Predicated region
    $region14: #{tpu_custom_call.1} parent=1 // pred_check
      _
    $region15: #{tpu_custom_call.1} parent=1 // pred_check_branch
      %51 = sbr.rel (0) target = $region17
    $region16: #{tpu_custom_call.1} parent=1 // pred_region
      _
    $region17: #{tpu_custom_call.1} parent=1 // pred_fallthru
      _
    // Predicated region
    $region18: #{tpu_custom_call.1} parent=1 // pred_check
      _
    $region19: #{tpu_custom_call.1} parent=1 // pred_check_branch
      %53 = sbr.rel (0) target = $region21
    $region20: #{tpu_custom_call.1} parent=1 // pred_region
      _
    $region21: #{tpu_custom_call.1} parent=1 // pred_fallthru
      _
    // Predicated region
    $region22: #{tpu_custom_call.1} parent=1 // pred_check
      _
    $region23: #{tpu_custom_call.1} parent=1 // pred_check_branch
      %55 = sbr.rel (0) target = $region25
    $region24: #{tpu_custom_call.1} parent=1 // pred_region
      _
    $region25: #{tpu_custom_call.1} parent=1 // pred_fallthru
      _
    // Predicated region
    $region26: #{tpu_custom_call.1} parent=1 // pred_check
      _
    $region27: #{tpu_custom_call.1} parent=1 // pred_check_branch
      %57 = sbr.rel (0) target = $region29
    $region28: #{tpu_custom_call.1} parent=1 // pred_region
      _
    $region29: #{tpu_custom_call.1} parent=1 // pred_fallthru
      _
    // Predicated region
    $region30: #{tpu_custom_call.1} parent=1 // pred_check
      _
    $region31: #{tpu_custom_call.1} parent=1 // pred_check_branch
      %59 = sbr.rel (0) target = $region33
    $region32: #{tpu_custom_call.1} parent=1 // pred_region
      %60 = dma.done [#allocation3], 4608
    $region33: #{tpu_custom_call.1} parent=1 // pred_fallthru
      _
    // Predicated region
    $region34: #{tpu_custom_call.1} parent=1 // pred_check
      _
    $region35: #{tpu_custom_call.1} parent=1 // pred_check_branch
      %62 = sbr.rel (0) target = $region37
    $region36: #{tpu_custom_call.1} parent=1 // pred_region
      %63 = dma.done [#allocation6], 512
    $region37: #{tpu_custom_call.1} parent=1 // pred_fallthru
      _
    // Predicated region
    $region38: #{tpu_custom_call.1} parent=1 // pred_check
      _
    $region39: #{tpu_custom_call.1} parent=1 // pred_check_branch
      %65 = sbr.rel (0) target = $region41
    $region40: #{tpu_custom_call.1} parent=1 // pred_region
      %66 = dma.done [#allocation6], 512
    $region41: #{tpu_custom_call.1} parent=1 // pred_fallthru
      _
    %v67 = vld [vmem:[#allocation5] sm:$0xff]
    %v68 = vld [vmem:[#allocation5 + $0x8] sm:$0xff]
    %v69 = vld [vmem:[#allocation5 + $0x10] sm:$0xff]
    %v70 = vld [vmem:[#allocation5 + $0x18] sm:$0xff]
    %v71 = vld [vmem:[#allocation7] sm:$0xff]
    %v72 = vld [vmem:[#allocation7 + $0x8] sm:$0xff]
    %v73 = vld [vmem:[#allocation7 + $0x10] sm:$0xff]
    %v74 = vld [vmem:[#allocation7 + $0x18] sm:$0xff]
    %v75 = vld [vmem:[#allocation2] sm:$0xff]
    %v76 = vld [vmem:[#allocation2 + $0x8] sm:$0xff]
    %v77 = vld [vmem:[#allocation2 + $0x10] sm:$0xff]
    %v78 = vld [vmem:[#allocation2 + $0x18] sm:$0xff]
    %v79 = vld [vmem:[#allocation2 + $0x20] sm:$0xff]
    %v80 = vld [vmem:[#allocation2 + $0x28] sm:$0xff]
    %v81 = vld [vmem:[#allocation2 + $0x30] sm:$0xff]
    %v82 = vld [vmem:[#allocation2 + $0x38] sm:$0xff]
    %v83 = vld [vmem:[#allocation2 + $0x40] sm:$0xff]
    %v84 = vld [vmem:[#allocation2 + $0x48] sm:$0xff]
    %v85 = vld [vmem:[#allocation2 + $0x50] sm:$0xff]
    %v86 = vld [vmem:[#allocation2 + $0x58] sm:$0xff]
    %v87 = vld [vmem:[#allocation2 + $0x60] sm:$0xff]
    %v88 = vld [vmem:[#allocation2 + $0x68] sm:$0xff]
    %v89 = vld [vmem:[#allocation2 + $0x70] sm:$0xff]
    %v90 = vld [vmem:[#allocation2 + $0x78] sm:$0xff]
    %v91 = vld [vmem:[#allocation2 + $0x80] sm:$0xff]
    %v92 = vld [vmem:[#allocation2 + $0x88] sm:$0xff]
    %v93 = vld [vmem:[#allocation2 + $0x90] sm:$0xff]
    %v94 = vld [vmem:[#allocation2 + $0x98] sm:$0xff]
    %v95 = vld [vmem:[#allocation2 + $0xa0] sm:$0xff]
    %v96 = vld [vmem:[#allocation2 + $0xa8] sm:$0xff]
    %v97 = vld [vmem:[#allocation2 + $0xb0] sm:$0xff]
    %v98 = vld [vmem:[#allocation2 + $0xb8] sm:$0xff]
    %v99 = vld [vmem:[#allocation2 + $0xc0] sm:$0xff]
    %v100 = vld [vmem:[#allocation2 + $0xc8] sm:$0xff]
    %v101 = vld [vmem:[#allocation2 + $0xd0] sm:$0xff]
    %v102 = vld [vmem:[#allocation2 + $0xd8] sm:$0xff]
    %v103 = vld [vmem:[#allocation2 + $0xe0] sm:$0xff]
    %v104 = vld [vmem:[#allocation2 + $0xe8] sm:$0xff]
    %v105 = vld [vmem:[#allocation2 + $0xf0] sm:$0xff]
    %v106 = vld [vmem:[#allocation2 + $0xf8] sm:$0xff]
    %v107 = vld [vmem:[#allocation2 + $0x100] sm:$0xff]
    %v108 = vld [vmem:[#allocation2 + $0x108] sm:$0xff]
    %v109 = vld [vmem:[#allocation2 + $0x110] sm:$0xff]
    %v110 = vld [vmem:[#allocation2 + $0x118] sm:$0xff]
    %111 = vrot.lane.b32.xlu0 %v67, 17
    %v112 = vpop.permute.xlu0 %111
    %113 = vrot.lane.b32.xlu0 %v68, 17
    %v114 = vpop.permute.xlu0 %113
    %115 = vrot.lane.b32.xlu0 %v69, 17
    %v116 = vpop.permute.xlu0 %115
    %117 = vrot.lane.b32.xlu0 %v70, 17
    %v118 = vpop.permute.xlu0 %117
    %v119 = vlaneseq
    %v120 = vand.u32 %v119, 127
    %vm121 = vcmp.lt.s32.totalorder %v120, 17
    %v122 = vsel %vm121, %v116, %v118
    %v123 = vsel %vm121, %v114, %v116
    %v124 = vsel %vm121, %v112, %v114
    %v125 = vsel %vm121, %v118, %v112
    %126 = vrot.lane.b32.xlu0 %v67, 16
    %v127 = vpop.permute.xlu0 %126
    %128 = vrot.lane.b32.xlu0 %v68, 16
    %v129 = vpop.permute.xlu0 %128
    %130 = vrot.lane.b32.xlu0 %v69, 16
    %v131 = vpop.permute.xlu0 %130
    %132 = vrot.lane.b32.xlu0 %v70, 16
    %v133 = vpop.permute.xlu0 %132
    %vm134 = vcmp.lt.s32.totalorder %v120, 16
    %v135 = vsel %vm134, %v131, %v133
    %v136 = vsel %vm134, %v129, %v131
    %v137 = vsel %vm134, %v127, %v129
    %v138 = vsel %vm134, %v133, %v127
    %139 = vrot.lane.b32.xlu0 %v67, 15
    %v140 = vpop.permute.xlu0 %139
    %141 = vrot.lane.b32.xlu0 %v68, 15
    %v142 = vpop.permute.xlu0 %141
    %143 = vrot.lane.b32.xlu0 %v69, 15
    %v144 = vpop.permute.xlu0 %143
    %145 = vrot.lane.b32.xlu0 %v70, 15
    %v146 = vpop.permute.xlu0 %145
    %vm147 = vcmp.lt.s32.totalorder %v120, 15
    %v148 = vsel %vm147, %v144, %v146
    %v149 = vsel %vm147, %v142, %v144
    %v150 = vsel %vm147, %v140, %v142
    %v151 = vsel %vm147, %v146, %v140
    %152 = vrot.lane.b32.xlu0 %v67, 1
    %v153 = vpop.permute.xlu0 %152
    %154 = vrot.lane.b32.xlu0 %v68, 1
    %v155 = vpop.permute.xlu0 %154
    %156 = vrot.lane.b32.xlu0 %v69, 1
    %v157 = vpop.permute.xlu0 %156
    %158 = vrot.lane.b32.xlu0 %v70, 1
    %v159 = vpop.permute.xlu0 %158
    %vm160 = vcmp.lt.s32.totalorder %v120, 1
    %v161 = vsel %vm160, %v157, %v159
    %v162 = vsel %vm160, %v155, %v157
    %v163 = vsel %vm160, %v153, %v155
    %v164 = vsel %vm160, %v159, %v153
    %165 = vrot.lane.b32.xlu0 %v67, 127
    %v166 = vpop.permute.xlu0 %165
    %167 = vrot.lane.b32.xlu0 %v68, 127
    %v168 = vpop.permute.xlu0 %167
    %169 = vrot.lane.b32.xlu0 %v69, 127
    %v170 = vpop.permute.xlu0 %169
    %171 = vrot.lane.b32.xlu0 %v70, 127
    %v172 = vpop.permute.xlu0 %171
    %vm173 = vcmp.lt.s32.totalorder %v120, 127
    %v174 = vsel %vm173, %v170, %v172
    %v175 = vsel %vm173, %v168, %v170
    %v176 = vsel %vm173, %v166, %v168
    %v177 = vsel %vm173, %v172, %v166
    %178 = vrot.lane.b32.xlu0 %v67, 113
    %v179 = vpop.permute.xlu0 %178
    %180 = vrot.lane.b32.xlu0 %v68, 113
    %v181 = vpop.permute.xlu0 %180
    %182 = vrot.lane.b32.xlu0 %v69, 113
    %v183 = vpop.permute.xlu0 %182
    %184 = vrot.lane.b32.xlu0 %v70, 113
    %v185 = vpop.permute.xlu0 %184
    %vm186 = vcmp.lt.s32.totalorder %v120, 113
    %v187 = vsel %vm186, %v183, %v185
    %v188 = vsel %vm186, %v181, %v183
    %v189 = vsel %vm186, %v179, %v181
    %v190 = vsel %vm186, %v185, %v179
    %191 = vrot.lane.b32.xlu0 %v67, 112
    %v192 = vpop.permute.xlu0 %191
    %193 = vrot.lane.b32.xlu0 %v68, 112
    %v194 = vpop.permute.xlu0 %193
    %195 = vrot.lane.b32.xlu0 %v69, 112
    %v196 = vpop.permute.xlu0 %195
    %197 = vrot.lane.b32.xlu0 %v70, 112
    %v198 = vpop.permute.xlu0 %197
    %vm199 = vcmp.lt.s32.totalorder %v120, 112
    %v200 = vsel %vm199, %v196, %v198
    %v201 = vsel %vm199, %v194, %v196
    %v202 = vsel %vm199, %v192, %v194
    %v203 = vsel %vm199, %v198, %v192
    %204 = vrot.lane.b32.xlu0 %v67, 111
    %v205 = vpop.permute.xlu0 %204
    %206 = vrot.lane.b32.xlu0 %v68, 111
    %v207 = vpop.permute.xlu0 %206
    %208 = vrot.lane.b32.xlu0 %v69, 111
    %v209 = vpop.permute.xlu0 %208
    %210 = vrot.lane.b32.xlu0 %v70, 111
    %v211 = vpop.permute.xlu0 %210
    %vm212 = vcmp.lt.s32.totalorder %v120, 111
    %v213 = vsel %vm212, %v209, %v211
    %v214 = vsel %vm212, %v207, %v209
    %v215 = vsel %vm212, %v205, %v207
    %v216 = vsel %vm212, %v211, %v205
    %v217 = vmul.f32 %v125, %v75
    %v218 = vmul.f32 %v124, %v76
    %v219 = vmul.f32 %v123, %v77
    %v220 = vmul.f32 %v122, %v78
    %v221 = vmul.f32 %v138, %v79
    %v222 = vmul.f32 %v137, %v80
    %v223 = vmul.f32 %v136, %v81
    %v224 = vmul.f32 %v135, %v82
    %v225 = vmul.f32 %v151, %v83
    %v226 = vmul.f32 %v150, %v84
    %v227 = vmul.f32 %v149, %v85
    %v228 = vmul.f32 %v148, %v86
    %v229 = vmul.f32 %v164, %v87
    %v230 = vmul.f32 %v163, %v88
    %v231 = vmul.f32 %v162, %v89
    %v232 = vmul.f32 %v161, %v90
    %v233 = vmul.f32 %v67, %v91
    %v234 = vmul.f32 %v68, %v92
    %v235 = vmul.f32 %v69, %v93
    %v236 = vmul.f32 %v70, %v94
    %v237 = vmul.f32 %v176, %v95
    %v238 = vmul.f32 %v175, %v96
    %v239 = vmul.f32 %v174, %v97
    %v240 = vmul.f32 %v177, %v98
    %v241 = vmul.f32 %v189, %v99
    %v242 = vmul.f32 %v188, %v100
    %v243 = vmul.f32 %v187, %v101
    %v244 = vmul.f32 %v190, %v102
    %v245 = vmul.f32 %v202, %v103
    %v246 = vmul.f32 %v201, %v104
    %v247 = vmul.f32 %v200, %v105
    %v248 = vmul.f32 %v203, %v106
    %v249 = vmul.f32 %v215, %v107
    %v250 = vmul.f32 %v214, %v108
    %v251 = vmul.f32 %v213, %v109
    %v252 = vmul.f32 %v216, %v110
    %253 = vrot.lane.b32.xlu0 %v71, 17
    %v254 = vpop.permute.xlu0 %253
    %255 = vrot.lane.b32.xlu0 %v72, 17
    %v256 = vpop.permute.xlu0 %255
    %257 = vrot.lane.b32.xlu0 %v73, 17
    %v258 = vpop.permute.xlu0 %257
    %259 = vrot.lane.b32.xlu0 %v74, 17
    %v260 = vpop.permute.xlu0 %259
    %v261 = vsel %vm121, %v258, %v260
    %v262 = vsel %vm121, %v256, %v258
    %v263 = vsel %vm121, %v254, %v256
    %v264 = vsel %vm121, %v260, %v254
    %265 = vrot.lane.b32.xlu0 %v71, 16
    %v266 = vpop.permute.xlu0 %265
    %267 = vrot.lane.b32.xlu0 %v72, 16
    %v268 = vpop.permute.xlu0 %267
    %269 = vrot.lane.b32.xlu0 %v73, 16
    %v270 = vpop.permute.xlu0 %269
    %271 = vrot.lane.b32.xlu0 %v74, 16
    %v272 = vpop.permute.xlu0 %271
    %v273 = vsel %vm134, %v270, %v272
    %v274 = vsel %vm134, %v268, %v270
    %v275 = vsel %vm134, %v266, %v268
    %v276 = vsel %vm134, %v272, %v266
    %277 = vrot.lane.b32.xlu0 %v71, 15
    %v278 = vpop.permute.xlu0 %277
    %279 = vrot.lane.b32.xlu0 %v72, 15
    %v280 = vpop.permute.xlu0 %279
    %281 = vrot.lane.b32.xlu0 %v73, 15
    %v282 = vpop.permute.xlu0 %281
    %283 = vrot.lane.b32.xlu0 %v74, 15
    %v284 = vpop.permute.xlu0 %283
    %v285 = vsel %vm147, %v282, %v284
    %v286 = vsel %vm147, %v280, %v282
    %v287 = vsel %vm147, %v278, %v280
    %v288 = vsel %vm147, %v284, %v278
    %289 = vrot.lane.b32.xlu0 %v71, 1
    %v290 = vpop.permute.xlu0 %289
    %291 = vrot.lane.b32.xlu0 %v72, 1
    %v292 = vpop.permute.xlu0 %291
    %293 = vrot.lane.b32.xlu0 %v73, 1
    %v294 = vpop.permute.xlu0 %293
    %295 = vrot.lane.b32.xlu0 %v74, 1
    %v296 = vpop.permute.xlu0 %295
    %v297 = vsel %vm160, %v294, %v296
    %v298 = vsel %vm160, %v292, %v294
    %v299 = vsel %vm160, %v290, %v292
    %v300 = vsel %vm160, %v296, %v290
    %301 = vrot.lane.b32.xlu0 %v71, 127
    %v302 = vpop.permute.xlu0 %301
    %303 = vrot.lane.b32.xlu0 %v72, 127
    %v304 = vpop.permute.xlu0 %303
    %305 = vrot.lane.b32.xlu0 %v73, 127
    %v306 = vpop.permute.xlu0 %305
    %307 = vrot.lane.b32.xlu0 %v74, 127
    %v308 = vpop.permute.xlu0 %307
    %v309 = vsel %vm173, %v306, %v308
    %v310 = vsel %vm173, %v304, %v306
    %v311 = vsel %vm173, %v302, %v304
    %v312 = vsel %vm173, %v308, %v302
    %313 = vrot.lane.b32.xlu0 %v71, 113
    %v314 = vpop.permute.xlu0 %313
    %315 = vrot.lane.b32.xlu0 %v72, 113
    %v316 = vpop.permute.xlu0 %315
    %317 = vrot.lane.b32.xlu0 %v73, 113
    %v318 = vpop.permute.xlu0 %317
    %319 = vrot.lane.b32.xlu0 %v74, 113
    %v320 = vpop.permute.xlu0 %319
    %v321 = vsel %vm186, %v318, %v320
    %v322 = vsel %vm186, %v316, %v318
    %v323 = vsel %vm186, %v314, %v316
    %v324 = vsel %vm186, %v320, %v314
    %325 = vrot.lane.b32.xlu0 %v71, 112
    %v326 = vpop.permute.xlu0 %325
    %327 = vrot.lane.b32.xlu0 %v72, 112
    %v328 = vpop.permute.xlu0 %327
    %329 = vrot.lane.b32.xlu0 %v73, 112
    %v330 = vpop.permute.xlu0 %329
    %331 = vrot.lane.b32.xlu0 %v74, 112
    %v332 = vpop.permute.xlu0 %331
    %v333 = vsel %vm199, %v330, %v332
    %v334 = vsel %vm199, %v328, %v330
    %v335 = vsel %vm199, %v326, %v328
    %v336 = vsel %vm199, %v332, %v326
    %337 = vrot.lane.b32.xlu0 %v71, 111
    %v338 = vpop.permute.xlu0 %337
    %339 = vrot.lane.b32.xlu0 %v72, 111
    %v340 = vpop.permute.xlu0 %339
    %341 = vrot.lane.b32.xlu0 %v73, 111
    %v342 = vpop.permute.xlu0 %341
    %343 = vrot.lane.b32.xlu0 %v74, 111
    %v344 = vpop.permute.xlu0 %343
    %v345 = vsel %vm212, %v342, %v344
    %v346 = vsel %vm212, %v340, %v342
    %v347 = vsel %vm212, %v338, %v340
    %v348 = vsel %vm212, %v344, %v338
    %v349 = vmul.f32 %v264, %v75
    %v350 = vmul.f32 %v263, %v76
    %v351 = vmul.f32 %v262, %v77
    %v352 = vmul.f32 %v261, %v78
    %v353 = vmul.f32 %v276, %v79
    %v354 = vmul.f32 %v275, %v80
    %v355 = vmul.f32 %v274, %v81
    %v356 = vmul.f32 %v273, %v82
    %v357 = vmul.f32 %v288, %v83
    %v358 = vmul.f32 %v287, %v84
    %v359 = vmul.f32 %v286, %v85
    %v360 = vmul.f32 %v285, %v86
    %v361 = vmul.f32 %v300, %v87
    %v362 = vmul.f32 %v299, %v88
    %v363 = vmul.f32 %v298, %v89
    %v364 = vmul.f32 %v297, %v90
    %v365 = vmul.f32 %v71, %v91
    %v366 = vmul.f32 %v72, %v92
    %v367 = vmul.f32 %v73, %v93
    %v368 = vmul.f32 %v74, %v94
    %v369 = vmul.f32 %v311, %v95
    %v370 = vmul.f32 %v310, %v96
    %v371 = vmul.f32 %v309, %v97
    %v372 = vmul.f32 %v312, %v98
    %v373 = vmul.f32 %v323, %v99
    %v374 = vmul.f32 %v322, %v100
    %v375 = vmul.f32 %v321, %v101
    %v376 = vmul.f32 %v324, %v102
    %v377 = vmul.f32 %v335, %v103
    %v378 = vmul.f32 %v334, %v104
    %v379 = vmul.f32 %v333, %v105
    %v380 = vmul.f32 %v336, %v106
    %v381 = vmul.f32 %v347, %v107
    %v382 = vmul.f32 %v346, %v108
    %v383 = vmul.f32 %v345, %v109
    %v384 = vmul.f32 %v348, %v110
    %v385 = vld [vmem:[%s3] sm:$0xff]
    %v386 = vld [vmem:[%s4] sm:$0xff]
    %388 = vset.pattern.permute.xlu0 0
    %389 = vperm.xlu0 %388, %v386
    %v390 = vpop.permute.xlu0 %389
    %vm392 = vcmask 588800
    %v394 = vsel %vm392, %v385, 0
    %396 = vmatprep.subr.mxu0 0.0
    %397 = vmatpush1.msra.mxu0 0.0
    %398 = vmatprep.subr.mxu0 0.0
    %399 = vmatpush1.msra.mxu0 0.0
    %400 = vmatprep.subr.mxu0 0.0
    %401 = vmatpush1.msra.mxu0 0.0
    %402 = vmatprep.subr.mxu0 0.0
    %403 = vmatpush1.msra.mxu0 0.0
    %404 = vmatprep.subr.mxu0 0.0
    %405 = vmatpush1.msra.mxu0 0.0
    %406 = vmatprep.subr.mxu0 0.0
    %407 = vmatpush1.msra.mxu0 0.0
    %408 = vmatprep.subr.mxu0 0.0
    %409 = vmatpush1.msra.mxu0 0.0
    %410 = vmatprep.subr.mxu0 %v250
    %411 = vmatpush1.msra.mxu0 %v249
    %412 = vmatprep.subr.mxu0 %v246
    %413 = vmatpush1.msra.mxu0 %v245
    %414 = vmatprep.subr.mxu0 %v242
    %415 = vmatpush1.msra.mxu0 %v241
    %416 = vmatprep.subr.mxu0 %v238
    %417 = vmatpush1.msra.mxu0 %v237
    %418 = vmatprep.subr.mxu0 %v234
    %419 = vmatpush1.msra.mxu0 %v233
    %420 = vmatprep.subr.mxu0 %v230
    %421 = vmatpush1.msra.mxu0 %v229
    %422 = vmatprep.subr.mxu0 %v226
    %423 = vmatpush1.msra.mxu0 %v225
    %424 = vmatprep.subr.mxu0 %v222
    %425 = vmatpush1.msra.mxu0 %v221
    %426 = vmatprep.subr.mxu0 %v218
    %427 = vmatpush1.msra.mxu0 %v217
    %428 = vmatprep.subr.mxu0 0.0
    %429 = vmatpush2.msra.mxu0 0.0
    %430 = vmatprep.subr.mxu0 0.0
    %431 = vmatpush2.msra.mxu0 0.0
    %432 = vmatprep.subr.mxu0 0.0
    %433 = vmatpush2.msra.mxu0 0.0
    %434 = vmatprep.subr.mxu0 0.0
    %435 = vmatpush2.msra.mxu0 0.0
    %436 = vmatprep.subr.mxu0 0.0
    %437 = vmatpush2.msra.mxu0 0.0
    %438 = vmatprep.subr.mxu0 0.0
    %439 = vmatpush2.msra.mxu0 0.0
    %440 = vmatprep.subr.mxu0 0.0
    %441 = vmatpush2.msra.mxu0 0.0
    %442 = vmatprep.subr.mxu0 0.0
    %443 = vmatpush2.msra.mxu0 0.0
    %444 = vmatprep.subr.mxu0 0.0
    %445 = vmatpush2.msra.mxu0 0.0
    %446 = vmatprep.subr.mxu0 0.0
    %447 = vmatpush2.msra.mxu0 0.0
    %448 = vmatprep.subr.mxu0 0.0
    %449 = vmatpush2.msra.mxu0 0.0
    %450 = vmatprep.subr.mxu0 0.0
    %451 = vmatpush2.msra.mxu0 0.0
    %452 = vmatprep.subr.mxu0 0.0
    %453 = vmatpush2.msra.mxu0 0.0
    %454 = vmatprep.subr.mxu0 0.0
    %455 = vmatpush2.msra.mxu0 0.0
    %456 = vmatprep.subr.mxu0 0.0
    %457 = vmatpush2.msra.mxu0 0.0
    %458 = vmatprep.subr.mxu0 0.0
    %459 = vmatpush2.msra.mxu0 0.0
    %460 = vmatprep.mubr.f32.mxu0 0.0
    %461 = vmatmul.mubr.f32.gmra.mxu0 %v394
    %v462 = vpop.f32.mrf.mxu0
    %v463 = vadd.f32 %v390, %v462
    %v464 = vpop.f32.mrf.mxu0
    %v465 = vadd.f32 %v390, %v464
    %466 = vdwg.mxu0
    %467 = vmatprep.subr.mxu0 0.0
    %468 = vmatpush1.msra.mxu0 0.0
    %469 = vmatprep.subr.mxu0 0.0
    %470 = vmatpush1.msra.mxu0 0.0
    %471 = vmatprep.subr.mxu0 0.0
    %472 = vmatpush1.msra.mxu0 0.0
    %473 = vmatprep.subr.mxu0 0.0
    %474 = vmatpush1.msra.mxu0 0.0
    %475 = vmatprep.subr.mxu0 0.0
    %476 = vmatpush1.msra.mxu0 0.0
    %477 = vmatprep.subr.mxu0 0.0
    %478 = vmatpush1.msra.mxu0 0.0
    %479 = vmatprep.subr.mxu0 0.0
    %480 = vmatpush1.msra.mxu0 0.0
    %481 = vmatprep.subr.mxu0 %v252
    %482 = vmatpush1.msra.mxu0 %v251
    %483 = vmatprep.subr.mxu0 %v248
    %484 = vmatpush1.msra.mxu0 %v247
    %485 = vmatprep.subr.mxu0 %v244
    %486 = vmatpush1.msra.mxu0 %v243
    %487 = vmatprep.subr.mxu0 %v240
    %488 = vmatpush1.msra.mxu0 %v239
    %489 = vmatprep.subr.mxu0 %v236
    %490 = vmatpush1.msra.mxu0 %v235
    %491 = vmatprep.subr.mxu0 %v232
    %492 = vmatpush1.msra.mxu0 %v231
    %493 = vmatprep.subr.mxu0 %v228
    %494 = vmatpush1.msra.mxu0 %v227
    %495 = vmatprep.subr.mxu0 %v224
    %496 = vmatpush1.msra.mxu0 %v223
    %497 = vmatprep.subr.mxu0 %v220
    %498 = vmatpush1.msra.mxu0 %v219
    %499 = vmatprep.subr.mxu0 0.0
    %500 = vmatpush2.msra.mxu0 0.0
    %501 = vmatprep.subr.mxu0 0.0
    %502 = vmatpush2.msra.mxu0 0.0
    %503 = vmatprep.subr.mxu0 0.0
    %504 = vmatpush2.msra.mxu0 0.0
    %505 = vmatprep.subr.mxu0 0.0
    %506 = vmatpush2.msra.mxu0 0.0
    %507 = vmatprep.subr.mxu0 0.0
    %508 = vmatpush2.msra.mxu0 0.0
    %509 = vmatprep.subr.mxu0 0.0
    %510 = vmatpush2.msra.mxu0 0.0
    %511 = vmatprep.subr.mxu0 0.0
    %512 = vmatpush2.msra.mxu0 0.0
    %513 = vmatprep.subr.mxu0 0.0
    %514 = vmatpush2.msra.mxu0 0.0
    %515 = vmatprep.subr.mxu0 0.0
    %516 = vmatpush2.msra.mxu0 0.0
    %517 = vmatprep.subr.mxu0 0.0
    %518 = vmatpush2.msra.mxu0 0.0
    %519 = vmatprep.subr.mxu0 0.0
    %520 = vmatpush2.msra.mxu0 0.0
    %521 = vmatprep.subr.mxu0 0.0
    %522 = vmatpush2.msra.mxu0 0.0
    %523 = vmatprep.subr.mxu0 0.0
    %524 = vmatpush2.msra.mxu0 0.0
    %525 = vmatprep.subr.mxu0 0.0
    %526 = vmatpush2.msra.mxu0 0.0
    %527 = vmatprep.subr.mxu0 0.0
    %528 = vmatpush2.msra.mxu0 0.0
    %529 = vmatprep.subr.mxu0 0.0
    %530 = vmatpush2.msra.mxu0 0.0
    %531 = vmatprep.mubr.f32.mxu0 0.0
    %532 = vmatmul.mubr.f32.gmra.mxu0 %v394
    %v533 = vpop.f32.mrf.mxu0
    %v534 = vadd.f32 %v390, %v533
    %v535 = vpop.f32.mrf.mxu0
    %v536 = vadd.f32 %v390, %v535
    %537 = vdwg.mxu0
    %v538 = vld [vmem:[%s5] sm:$0xff]
    %v539 = vld [vmem:[%s6] sm:$0xff]
    %541 = vset.pattern.permute.xlu0 0
    %542 = vperm.xlu0 %541, %v539
    %v543 = vpop.permute.xlu0 %542
    %v546 = vsel %vm392, %v538, 0
    %548 = vmatprep.subr.mxu0 0.0
    %549 = vmatpush1.msra.mxu0 0.0
    %550 = vmatprep.subr.mxu0 0.0
    %551 = vmatpush1.msra.mxu0 0.0
    %552 = vmatprep.subr.mxu0 0.0
    %553 = vmatpush1.msra.mxu0 0.0
    %554 = vmatprep.subr.mxu0 0.0
    %555 = vmatpush1.msra.mxu0 0.0
    %556 = vmatprep.subr.mxu0 0.0
    %557 = vmatpush1.msra.mxu0 0.0
    %558 = vmatprep.subr.mxu0 0.0
    %559 = vmatpush1.msra.mxu0 0.0
    %560 = vmatprep.subr.mxu0 0.0
    %561 = vmatpush1.msra.mxu0 0.0
    %562 = vmatprep.subr.mxu0 %v382
    %563 = vmatpush1.msra.mxu0 %v381
    %564 = vmatprep.subr.mxu0 %v378
    %565 = vmatpush1.msra.mxu0 %v377
    %566 = vmatprep.subr.mxu0 %v374
    %567 = vmatpush1.msra.mxu0 %v373
    %568 = vmatprep.subr.mxu0 %v370
    %569 = vmatpush1.msra.mxu0 %v369
    %570 = vmatprep.subr.mxu0 %v366
    %571 = vmatpush1.msra.mxu0 %v365
    %572 = vmatprep.subr.mxu0 %v362
    %573 = vmatpush1.msra.mxu0 %v361
    %574 = vmatprep.subr.mxu0 %v358
    %575 = vmatpush1.msra.mxu0 %v357
    %576 = vmatprep.subr.mxu0 %v354
    %577 = vmatpush1.msra.mxu0 %v353
    %578 = vmatprep.subr.mxu0 %v350
    %579 = vmatpush1.msra.mxu0 %v349
    %580 = vmatprep.subr.mxu0 0.0
    %581 = vmatpush2.msra.mxu0 0.0
    %582 = vmatprep.subr.mxu0 0.0
    %583 = vmatpush2.msra.mxu0 0.0
    %584 = vmatprep.subr.mxu0 0.0
    %585 = vmatpush2.msra.mxu0 0.0
    %586 = vmatprep.subr.mxu0 0.0
    %587 = vmatpush2.msra.mxu0 0.0
    %588 = vmatprep.subr.mxu0 0.0
    %589 = vmatpush2.msra.mxu0 0.0
    %590 = vmatprep.subr.mxu0 0.0
    %591 = vmatpush2.msra.mxu0 0.0
    %592 = vmatprep.subr.mxu0 0.0
    %593 = vmatpush2.msra.mxu0 0.0
    %594 = vmatprep.subr.mxu0 0.0
    %595 = vmatpush2.msra.mxu0 0.0
    %596 = vmatprep.subr.mxu0 0.0
    %597 = vmatpush2.msra.mxu0 0.0
    %598 = vmatprep.subr.mxu0 0.0
    %599 = vmatpush2.msra.mxu0 0.0
    %600 = vmatprep.subr.mxu0 0.0
    %601 = vmatpush2.msra.mxu0 0.0
    %602 = vmatprep.subr.mxu0 0.0
    %603 = vmatpush2.msra.mxu0 0.0
    %604 = vmatprep.subr.mxu0 0.0
    %605 = vmatpush2.msra.mxu0 0.0
    %606 = vmatprep.subr.mxu0 0.0
    %607 = vmatpush2.msra.mxu0 0.0
    %608 = vmatprep.subr.mxu0 0.0
    %609 = vmatpush2.msra.mxu0 0.0
    %610 = vmatprep.subr.mxu0 0.0
    %611 = vmatpush2.msra.mxu0 0.0
    %612 = vmatprep.mubr.f32.mxu0 0.0
    %613 = vmatmul.mubr.f32.gmra.mxu0 %v546
    %v614 = vpop.f32.mrf.mxu0
    %v615 = vadd.f32 %v543, %v614
    %v616 = vpop.f32.mrf.mxu0
    %v617 = vadd.f32 %v543, %v616
    %618 = vdwg.mxu0
    %619 = vmatprep.subr.mxu0 0.0
    %620 = vmatpush1.msra.mxu0 0.0
    %621 = vmatprep.subr.mxu0 0.0
    %622 = vmatpush1.msra.mxu0 0.0
    %623 = vmatprep.subr.mxu0 0.0
    %624 = vmatpush1.msra.mxu0 0.0
    %625 = vmatprep.subr.mxu0 0.0
    %626 = vmatpush1.msra.mxu0 0.0
    %627 = vmatprep.subr.mxu0 0.0
    %628 = vmatpush1.msra.mxu0 0.0
    %629 = vmatprep.subr.mxu0 0.0
    %630 = vmatpush1.msra.mxu0 0.0
    %631 = vmatprep.subr.mxu0 0.0
    %632 = vmatpush1.msra.mxu0 0.0
    %633 = vmatprep.subr.mxu0 %v384
    %634 = vmatpush1.msra.mxu0 %v383
    %635 = vmatprep.subr.mxu0 %v380
    %636 = vmatpush1.msra.mxu0 %v379
    %637 = vmatprep.subr.mxu0 %v376
    %638 = vmatpush1.msra.mxu0 %v375
    %639 = vmatprep.subr.mxu0 %v372
    %640 = vmatpush1.msra.mxu0 %v371
    %641 = vmatprep.subr.mxu0 %v368
    %642 = vmatpush1.msra.mxu0 %v367
    %643 = vmatprep.subr.mxu0 %v364
    %644 = vmatpush1.msra.mxu0 %v363
    %645 = vmatprep.subr.mxu0 %v360
    %646 = vmatpush1.msra.mxu0 %v359
    %647 = vmatprep.subr.mxu0 %v356
    %648 = vmatpush1.msra.mxu0 %v355
    %649 = vmatprep.subr.mxu0 %v352
    %650 = vmatpush1.msra.mxu0 %v351
    %651 = vmatprep.subr.mxu0 0.0
    %652 = vmatpush2.msra.mxu0 0.0
    %653 = vmatprep.subr.mxu0 0.0
    %654 = vmatpush2.msra.mxu0 0.0
    %655 = vmatprep.subr.mxu0 0.0
    %656 = vmatpush2.msra.mxu0 0.0
    %657 = vmatprep.subr.mxu0 0.0
    %658 = vmatpush2.msra.mxu0 0.0
    %659 = vmatprep.subr.mxu0 0.0
    %660 = vmatpush2.msra.mxu0 0.0
    %661 = vmatprep.subr.mxu0 0.0
    %662 = vmatpush2.msra.mxu0 0.0
    %663 = vmatprep.subr.mxu0 0.0
    %664 = vmatpush2.msra.mxu0 0.0
    %665 = vmatprep.subr.mxu0 0.0
    %666 = vmatpush2.msra.mxu0 0.0
    %667 = vmatprep.subr.mxu0 0.0
    %668 = vmatpush2.msra.mxu0 0.0
    %669 = vmatprep.subr.mxu0 0.0
    %670 = vmatpush2.msra.mxu0 0.0
    %671 = vmatprep.subr.mxu0 0.0
    %672 = vmatpush2.msra.mxu0 0.0
    %673 = vmatprep.subr.mxu0 0.0
    %674 = vmatpush2.msra.mxu0 0.0
    %675 = vmatprep.subr.mxu0 0.0
    %676 = vmatpush2.msra.mxu0 0.0
    %677 = vmatprep.subr.mxu0 0.0
    %678 = vmatpush2.msra.mxu0 0.0
    %679 = vmatprep.subr.mxu0 0.0
    %680 = vmatpush2.msra.mxu0 0.0
    %681 = vmatprep.subr.mxu0 0.0
    %682 = vmatpush2.msra.mxu0 0.0
    %683 = vmatprep.mubr.f32.mxu0 0.0
    %684 = vmatmul.mubr.f32.gmra.mxu0 %v546
    %v685 = vpop.f32.mrf.mxu0
    %v686 = vadd.f32 %v543, %v685
    %v687 = vpop.f32.mrf.mxu0
    %v688 = vadd.f32 %v543, %v687
    %689 = vdwg.mxu0
    %v690 = vmax.f32 %v463, 0.0
    %v691 = vmax.f32 %v465, 0.0
    %v692 = vmax.f32 %v534, 0.0
    %v693 = vmax.f32 %v536, 0.0
    %v694 = vmin.f32 %v615, 0.0
    %v695 = vmin.f32 %v617, 0.0
    %v696 = vmin.f32 %v686, 0.0
    %v697 = vmin.f32 %v688, 0.0
    %v698 = vadd.f32 %v690, %v694
    %v699 = vadd.f32 %v691, %v695
    %v700 = vadd.f32 %v692, %v696
    %v701 = vadd.f32 %v693, %v697
    %v702 = vmax.f32 %v615, 0.0
    %v703 = vmax.f32 %v617, 0.0
    %v704 = vmax.f32 %v686, 0.0
    %v705 = vmax.f32 %v688, 0.0
    %v706 = vmin.f32 %v463, 0.0
    %v707 = vmin.f32 %v465, 0.0
    %v708 = vmin.f32 %v534, 0.0
    %v709 = vmin.f32 %v536, 0.0
    %v710 = vadd.f32 %v702, %v706
    %v711 = vadd.f32 %v703, %v707
    %v712 = vadd.f32 %v704, %v708
    %v713 = vadd.f32 %v705, %v709
    %714 = vst [vmem:[#allocation8] sm:$0xff] %v698
    %715 = vst [vmem:[#allocation8 + $0x8] sm:$0xff] %v699
    %716 = vst [vmem:[#allocation8 + $0x10] sm:$0xff] %v700
    %717 = vst [vmem:[#allocation8 + $0x18] sm:$0xff] %v701
    %718 = vst [vmem:[#allocation9] sm:$0xff] %v710
    %719 = vst [vmem:[#allocation9 + $0x8] sm:$0xff] %v711
    %720 = vst [vmem:[#allocation9 + $0x10] sm:$0xff] %v712
    %721 = vst [vmem:[#allocation9 + $0x18] sm:$0xff] %v713
    // Predicated region
    $region42: #{tpu_custom_call.1} parent=1 // pred_check
      _
    $region43: #{tpu_custom_call.1} parent=1 // pred_check_branch
      %723 = sbr.rel (0) target = $region45
    $region44: #{tpu_custom_call.1} parent=1 // pred_region
      %s725 = ssub.s32 512, 512
      %726 = vsyncadd [#allocation4], %s725
      %s728 = sshll.u32 [#allocation8], 4
      %s729 = int_to_ptr.vmem [resolvable:$true] %s728
      %731 = dma.vmem_to_hbm [thread:$0]  %s729, 512, %s7, [#allocation4]
    $region45: #{tpu_custom_call.1} parent=1 // pred_fallthru
      _
    // Predicated region
    $region46: #{tpu_custom_call.1} parent=1 // pred_check
      _
    $region47: #{tpu_custom_call.1} parent=1 // pred_check_branch
      %733 = sbr.rel (0) target = $region49
    $region48: #{tpu_custom_call.1} parent=1 // pred_region
      %s735 = ssub.s32 512, 512
      %736 = vsyncadd [#allocation10], %s735
      %s738 = sshll.u32 [#allocation9], 4
      %s739 = int_to_ptr.vmem [resolvable:$true] %s738
      %741 = dma.vmem_to_hbm [thread:$0]  %s739, 512, %s8, [#allocation10]
    $region49: #{tpu_custom_call.1} parent=1 // pred_fallthru
      _
    // Predicated region
    $region50: #{tpu_custom_call.1} parent=1 // pred_check
      _
    $region51: #{tpu_custom_call.1} parent=1 // pred_check_branch
      %743 = sbr.rel (0) target = $region53
    $region52: #{tpu_custom_call.1} parent=1 // pred_region
      %744 = dma.done [#allocation4], 512
    $region53: #{tpu_custom_call.1} parent=1 // pred_fallthru
      _
    // Predicated region
    $region54: #{tpu_custom_call.1} parent=1 // pred_check
      _
    $region55: #{tpu_custom_call.1} parent=1 // pred_check_branch
      %746 = sbr.rel (0) target = $region57
    $region56: #{tpu_custom_call.1} parent=1 // pred_region
      %747 = dma.done [#allocation10], 512
    $region57: #{tpu_custom_call.1} parent=1 // pred_fallthru
      _
    %748 = vsyncpa [#allocation3], 1
    %749 = vsyncpa [#allocation6], 1
    %750 = vsyncpa [#allocation4], 1
    %751 = vsyncpa [#allocation10], 1

</llo_original>
